<compile_context>
chip_gen: v5e
topology: v5e:2x2
jax: 0.10.0
libtpu: 0.0.40
codegen_flags: <defaults>
</compile_context>

<pallas_src>
import jax
import jax.numpy as jnp
from jax.experimental import pallas as pl
from jax.experimental.pallas import tpu as pltpu


def _round_up(x, m):
    return ((x + m - 1) // m) * m


def qfunction_kernel(obs_ref, act_ref, w1o_ref, w1a_ref, b12_ref, w2_ref,
                     w3_ref, b3_ref, out_ref):
    # Layer 1 with the obs/action concat fused as a split-K pair of matmuls:
    #   h1 = [obs | act] @ W1  ==  obs @ W1[:obs_dim] + act @ W1[obs_dim:]
    h1 = jnp.dot(obs_ref[...], w1o_ref[...], preferred_element_type=jnp.float32)
    h1 = h1 + jnp.dot(act_ref[...], w1a_ref[...],
                      preferred_element_type=jnp.float32)
    h1 = jnp.maximum(h1 + b12_ref[0:1, :], 0.0)            # bias + ReLU in f32

    # Layer 2: [TB, H] @ [H, H].  Downcast only at the MXU boundary.
    h2 = jnp.dot(h1.astype(w2_ref.dtype), w2_ref[...],
                 preferred_element_type=jnp.float32)
    h2 = jnp.maximum(h2 + b12_ref[1:2, :], 0.0)

    # Layer 3 (N=1): VPU multiply + XLU lane reduce instead of a wasted MXU pass.
    w3_row = w3_ref[...].astype(jnp.float32)                # (1, H), broadcasts
    q = jnp.sum(h2 * w3_row, axis=-1, keepdims=True) + b3_ref[0, 0]
    out_ref[...] = q.astype(out_ref.dtype)


def init_qfunction_params(key, obs_dim, action_dim, hidden_dim):
    """PyTorch-style nn.Linear init (uniform +/- 1/sqrt(fan_in)), deterministic.

    Weights are stored as [in, out] (transposed w.r.t. torch's [out, in])."""
    def linear(key, fan_in, fan_out):
        kw, kb = jax.random.split(key)
        bound = 1.0 / jnp.sqrt(jnp.float32(fan_in))
        w = jax.random.uniform(kw, (fan_in, fan_out), jnp.float32, -bound, bound)
        b = jax.random.uniform(kb, (1, fan_out), jnp.float32, -bound, bound)
        return w, b

    k1, k2, k3 = jax.random.split(key, 3)
    w1, b1 = linear(k1, obs_dim + action_dim, hidden_dim)
    w2, b2 = linear(k2, hidden_dim, hidden_dim)
    w3, b3 = linear(k3, hidden_dim, 1)
    return dict(w1=w1, b1=b1, w2=w2, b2=b2, w3=w3, b3=b3)


def pack_qfunction_params(params, obs_dim, compute_dtype=jnp.float32):
    """One-time repack for the kernel (call once, NOT per forward step)."""
    hidden = params["w2"].shape[0]
    return dict(
        w1_obs=params["w1"][:obs_dim].astype(compute_dtype),   # (obs_dim, H)
        w1_act=params["w1"][obs_dim:].astype(compute_dtype),   # (act_dim, H)
        w2=params["w2"].astype(compute_dtype),                  # (H, H)
        w3_row=params["w3"].reshape(1, hidden).astype(compute_dtype),
        b12=jnp.concatenate([params["b1"], params["b2"]], axis=0)
            .astype(jnp.float32),                              # (2, H): b1, b2
        b3=params["b3"].reshape(1, 1).astype(jnp.float32),
    )


def qfunction_forward(obs, action, packed, *, block_b=1024,
                      compute_dtype=jnp.float32):
    assert obs.shape[0] == action.shape[0]
    B = obs.shape[0]
    obs_dim = packed["w1_obs"].shape[0]
    act_dim = packed["w1_act"].shape[0]
    hidden = packed["w1_obs"].shape[1]
    assert obs.shape[1] == obs_dim and action.shape[1] == act_dim

    obs = obs.astype(compute_dtype)
    action = action.astype(compute_dtype)

    # Batch tile: multiple of 8 (sublane), capped at block_b; pad B up to a
    # whole number of tiles so the tail block has no OOB reads.  For the
    # common RL batch sizes (128/256/512) no padding happens at all.
    tb = min(_round_up(B, 8), _round_up(block_b, 8))
    b_pad = _round_up(B, tb)
    if b_pad != B:
        obs = jnp.pad(obs, ((0, b_pad - B), (0, 0)))
        action = jnp.pad(action, ((0, b_pad - B), (0, 0)))
    grid = (b_pad // tb,)

    out = pl.pallas_call(
        qfunction_kernel,
        out_shape=jax.ShapeDtypeStruct((b_pad, 1), jnp.float32),
        grid=grid,
        in_specs=[
            pl.BlockSpec((tb, obs_dim), lambda i: (i, 0)),        # obs tile
            pl.BlockSpec((tb, act_dim), lambda i: (i, 0)),        # act tile
            pl.BlockSpec((obs_dim, hidden), lambda i: (0, 0)),    # W1[:obs_dim]
            pl.BlockSpec((act_dim, hidden), lambda i: (0, 0)),    # W1[obs_dim:]
            pl.BlockSpec((2, hidden), lambda i: (0, 0)),          # packed b1/b2
            pl.BlockSpec((hidden, hidden), lambda i: (0, 0)),     # W2
            pl.BlockSpec((1, hidden), lambda i: (0, 0)),          # W3 as a row
            pl.BlockSpec(memory_space=pltpu.MemorySpace.SMEM),    # b3 scalar
        ],
        out_specs=pl.BlockSpec((tb, 1), lambda i: (i, 0)),
        compiler_params=pltpu.CompilerParams(
            dimension_semantics=("parallel",)),
    )(obs, action, packed["w1_obs"], packed["w1_act"], packed["b12"],
      packed["w2"], packed["w3_row"], packed["b3"])

    return out[:B]


def qfunction_reference(obs, action, params):
    x = jnp.concatenate([obs, action], axis=1)
    h1 = jnp.maximum(x @ params["w1"] + params["b1"], 0.0)
    h2 = jnp.maximum(h1 @ params["w2"] + params["b2"], 0.0)
    return h2 @ params["w3"] + params["b3"]


if __name__ == "__main__":
    # Small shapes consistent with the module's forward.
    B, OBS_DIM, ACT_DIM, HIDDEN = 2, 24, 8, 32

    key = jax.random.PRNGKey(0)
    k_obs, k_act, k_params = jax.random.split(key, 3)

    obs = jax.random.normal(k_obs, (B, OBS_DIM), jnp.float32)
    action = jax.random.normal(k_act, (B, ACT_DIM), jnp.float32)
    params = init_qfunction_params(k_params, OBS_DIM, ACT_DIM, HIDDEN)
    packed = pack_qfunction_params(params, OBS_DIM)

    q = jax.block_until_ready(qfunction_forward(obs, action, packed))
    q_ref = qfunction_reference(obs, action, params)
    assert q.shape == (B, 1)
    assert jnp.allclose(q, q_ref, atol=1e-5, rtol=1e-5)

    # Exercise the multi-tile grid + tail-padding path with a bigger batch.
    B2 = 200
    k_obs2, k_act2 = jax.random.split(jax.random.PRNGKey(1))
    obs2 = jax.random.normal(k_obs2, (B2, OBS_DIM), jnp.float32)
    act2 = jax.random.normal(k_act2, (B2, ACT_DIM), jnp.float32)
    q2 = jax.block_until_ready(qfunction_forward(obs2, act2, packed, block_b=64))
    q2_ref = qfunction_reference(obs2, act2, params)
    assert q2.shape == (B2, 1)
    assert jnp.allclose(q2, q2_ref, atol=1e-5, rtol=1e-5)

    print("KERNEL_OK")
</pallas_src>

<mosaic_0001>
module attributes {stable_mosaic.version = 11 : i64} {
  func.func @qfunction_kernel(%arg0: i32, %arg1: memref<8x24xf32, #tpu.memory_space<vmem>>, %arg2: memref<8x8xf32, #tpu.memory_space<vmem>>, %arg3: memref<24x32xf32, #tpu.memory_space<vmem>>, %arg4: memref<8x32xf32, #tpu.memory_space<vmem>>, %arg5: memref<2x32xf32, #tpu.memory_space<vmem>>, %arg6: memref<32x32xf32, #tpu.memory_space<vmem>>, %arg7: memref<1x32xf32, #tpu.memory_space<vmem>>, %arg8: memref<1x1xf32, #tpu.memory_space<smem>>, %arg9: memref<8x1xf32, #tpu.memory_space<vmem>>) attributes {dimension_semantics = [#tpu.dimension_semantics<parallel>], iteration_bounds = array<i64: 1>, scalar_prefetch = 0 : i64, scratch_operands = 0 : i64, tpu.core_type = #tpu.core_type<tc>, window_params = [{transform_indices = @transform_0, window_bounds = array<i64: 8, 24>}, {transform_indices = @transform_1, window_bounds = array<i64: 8, 8>}, {pipeline_mode = #tpu.pipeline_mode<synchronous>, transform_indices = @transform_2, window_bounds = array<i64: 24, 32>}, {pipeline_mode = #tpu.pipeline_mode<synchronous>, transform_indices = @transform_3, window_bounds = array<i64: 8, 32>}, {pipeline_mode = #tpu.pipeline_mode<synchronous>, transform_indices = @transform_4, window_bounds = array<i64: 2, 32>}, {pipeline_mode = #tpu.pipeline_mode<synchronous>, transform_indices = @transform_5, window_bounds = array<i64: 32, 32>}, {pipeline_mode = #tpu.pipeline_mode<synchronous>, transform_indices = @transform_6, window_bounds = array<i64: 1, 32>}, {transform_indices = @transform_7, window_bounds = array<i64: 1, 1>}, {transform_indices = @transform_8, window_bounds = array<i64: 8, 1>}]} {
    %c0 = arith.constant 0 : index
    %c0_0 = arith.constant 0 : index
    %0 = vector.load %arg1[%c0, %c0_0] : memref<8x24xf32, #tpu.memory_space<vmem>>, vector<8x24xf32>
    %c0_1 = arith.constant 0 : index
    %c0_2 = arith.constant 0 : index
    %1 = vector.load %arg3[%c0_1, %c0_2] : memref<24x32xf32, #tpu.memory_space<vmem>>, vector<24x32xf32>
    %cst = arith.constant dense<0.000000e+00> : vector<8x32xf32>
    %2 = tpu.matmul %0, %1, %cst {dimension_numbers = #tpu.dot_dimension_numbers<[1], [0], [0], [1], [0, 0, 1, 1], [], []>} : vector<8x24xf32>, vector<24x32xf32>, vector<8x32xf32> -> vector<8x32xf32>
    %c0_3 = arith.constant 0 : index
    %c0_4 = arith.constant 0 : index
    %3 = vector.load %arg2[%c0_3, %c0_4] : memref<8x8xf32, #tpu.memory_space<vmem>>, vector<8x8xf32>
    %c0_5 = arith.constant 0 : index
    %c0_6 = arith.constant 0 : index
    %4 = vector.load %arg4[%c0_5, %c0_6] : memref<8x32xf32, #tpu.memory_space<vmem>>, vector<8x32xf32>
    %cst_7 = arith.constant dense<0.000000e+00> : vector<8x32xf32>
    %5 = tpu.matmul %3, %4, %cst_7 {dimension_numbers = #tpu.dot_dimension_numbers<[1], [0], [0], [1], [0, 0, 1, 1], [], []>} : vector<8x8xf32>, vector<8x32xf32>, vector<8x32xf32> -> vector<8x32xf32>
    %6 = arith.addf %2, %5 : vector<8x32xf32>
    %c0_8 = arith.constant 0 : index
    %c0_9 = arith.constant 0 : index
    %7 = vector.load %arg5[%c0_8, %c0_9] : memref<2x32xf32, #tpu.memory_space<vmem>>, vector<1x32xf32>
    %8 = vector.broadcast %7 : vector<1x32xf32> to vector<8x32xf32>
    %9 = arith.addf %6, %8 : vector<8x32xf32>
    %cst_10 = arith.constant 0.000000e+00 : f32
    %10 = vector.broadcast %cst_10 : f32 to vector<8x32xf32>
    %11 = arith.maximumf %9, %10 : vector<8x32xf32>
    %c0_11 = arith.constant 0 : index
    %c0_12 = arith.constant 0 : index
    %12 = vector.load %arg6[%c0_11, %c0_12] : memref<32x32xf32, #tpu.memory_space<vmem>>, vector<32x32xf32>
    %cst_13 = arith.constant dense<0.000000e+00> : vector<8x32xf32>
    %13 = tpu.matmul %11, %12, %cst_13 {dimension_numbers = #tpu.dot_dimension_numbers<[1], [0], [0], [1], [0, 0, 1, 1], [], []>} : vector<8x32xf32>, vector<32x32xf32>, vector<8x32xf32> -> vector<8x32xf32>
    %c1 = arith.constant 1 : index
    %c0_14 = arith.constant 0 : index
    %14 = vector.load %arg5[%c1, %c0_14] : memref<2x32xf32, #tpu.memory_space<vmem>>, vector<1x32xf32>
    %15 = vector.broadcast %14 : vector<1x32xf32> to vector<8x32xf32>
    %16 = arith.addf %13, %15 : vector<8x32xf32>
    %cst_15 = arith.constant 0.000000e+00 : f32
    %17 = vector.broadcast %cst_15 : f32 to vector<8x32xf32>
    %18 = arith.maximumf %16, %17 : vector<8x32xf32>
    %c0_16 = arith.constant 0 : index
    %c0_17 = arith.constant 0 : index
    %19 = vector.load %arg7[%c0_16, %c0_17] : memref<1x32xf32, #tpu.memory_space<vmem>>, vector<1x32xf32>
    %20 = vector.broadcast %19 : vector<1x32xf32> to vector<8x32xf32>
    %21 = arith.mulf %18, %20 : vector<8x32xf32>
    %cst_18 = arith.constant dense<0.000000e+00> : vector<8xf32>
    %22 = vector.multi_reduction <add>, %21, %cst_18 [1] : vector<8x32xf32> to vector<8xf32>
    %23 = vector.shape_cast %22 : vector<8xf32> to vector<8x1xf32>
    %c0_19 = arith.constant 0 : index
    %c0_20 = arith.constant 0 : index
    %24 = memref.load %arg8[%c0_19, %c0_20] : memref<1x1xf32, #tpu.memory_space<smem>>
    %25 = vector.broadcast %24 : f32 to vector<8x1xf32>
    %26 = arith.addf %23, %25 : vector<8x1xf32>
    %c0_21 = arith.constant 0 : index
    %c0_22 = arith.constant 0 : index
    %27 = vector.load %arg9[%c0_21, %c0_22] : memref<8x1xf32, #tpu.memory_space<vmem>>, vector<8x1xf32>
    tpu.vector_store %arg9[%c0_21, %c0_22], %26 {strides = array<i32>} : memref<8x1xf32, #tpu.memory_space<vmem>>, vector<8x1xf32>,
    return
  }
  func.func @transform_0(%arg0: i32) -> (i32, i32) {
    %c0_i32 = arith.constant 0 : i32
    %c0_i32_0 = arith.constant 0 : i32
    return %arg0, %c0_i32 : i32, i32
  }
  func.func @transform_1(%arg0: i32) -> (i32, i32) {
    %c0_i32 = arith.constant 0 : i32
    %c0_i32_0 = arith.constant 0 : i32
    return %arg0, %c0_i32 : i32, i32
  }
  func.func @transform_2(%arg0: i32) -> (i32, i32) {
    %c0_i32 = arith.constant 0 : i32
    %c0_i32_0 = arith.constant 0 : i32
    %c0_i32_1 = arith.constant 0 : i32
    return %c0_i32, %c0_i32_0 : i32, i32
  }
  func.func @transform_3(%arg0: i32) -> (i32, i32) {
    %c0_i32 = arith.constant 0 : i32
    %c0_i32_0 = arith.constant 0 : i32
    %c0_i32_1 = arith.constant 0 : i32
    return %c0_i32, %c0_i32_0 : i32, i32
  }
  func.func @transform_4(%arg0: i32) -> (i32, i32) {
    %c0_i32 = arith.constant 0 : i32
    %c0_i32_0 = arith.constant 0 : i32
    %c0_i32_1 = arith.constant 0 : i32
    return %c0_i32, %c0_i32_0 : i32, i32
  }
  func.func @transform_5(%arg0: i32) -> (i32, i32) {
    %c0_i32 = arith.constant 0 : i32
    %c0_i32_0 = arith.constant 0 : i32
    %c0_i32_1 = arith.constant 0 : i32
    return %c0_i32, %c0_i32_0 : i32, i32
  }
  func.func @transform_6(%arg0: i32) -> (i32, i32) {
    %c0_i32 = arith.constant 0 : i32
    %c0_i32_0 = arith.constant 0 : i32
    %c0_i32_1 = arith.constant 0 : i32
    return %c0_i32, %c0_i32_0 : i32, i32
  }
  func.func @transform_7(%arg0: i32) -> (i32, i32) {
    %c0_i32 = arith.constant 0 : i32
    %c0_i32_0 = arith.constant 0 : i32
    %c0_i32_1 = arith.constant 0 : i32
    return %c0_i32, %c0_i32_0 : i32, i32
  }
  func.func @transform_8(%arg0: i32) -> (i32, i32) {
    %c0_i32 = arith.constant 0 : i32
    %c0_i32_0 = arith.constant 0 : i32
    return %arg0, %c0_i32 : i32, i32
  }
}

</mosaic_0001>

<llo_original>
// kernel: tpu_custom_call.1
$region0: #{tpu_custom_call.1}
  #allocation0 [shape = 'u32[]', space=smem, size = 0x4, offset = 0x4, fixed_abs, tag = 'smem constant byte address 0x4 - core index']
  #allocation1 [shape = 'u32[72,128]{1,0:T(1,128)}', space=vmem, size = 0x9000, scoped, tag = 'internal scratch']
  #allocation2 [shape = 'f32[1,1]{1,0:T(1,128)S(6)}', space=smem, size = 0x200, scoped, tag = 'scoped memory for tpu_custom_call.1']
  %s0 = inlined_call_operand.hbm [shape: f32[8,24], index: 0, kind: input, shape index: {}]
  %s1 = inlined_call_operand.hbm [shape: f32[8,8], index: 1, kind: input, shape index: {}]
  %s2 = inlined_call_operand.hbm [shape: f32[24,32], index: 2, kind: input, shape index: {}]
  %s3 = inlined_call_operand.hbm [shape: f32[8,32], index: 3, kind: input, shape index: {}]
  %s4 = inlined_call_operand.vmem [shape: f32[2,32], index: 4, kind: input, shape index: {}]
  %s5 = inlined_call_operand.hbm [shape: f32[32,32], index: 5, kind: input, shape index: {}]
  %s6 = inlined_call_operand.vmem [shape: f32[1,32], index: 6, kind: input, shape index: {}]
  %s7 = inlined_call_operand.<no memory space> [shape: f32[1,1], index: 7, kind: input, shape index: {}]
  %s8 = inlined_call_operand.vmem [shape: f32[8,1], index: 8, kind: output, shape index: {}]
  %s9 = sld [smem:[#allocation0]]
  $region62: #{tpu_custom_call.1} parent=0
    _
  %s11 = ssub.s32 1, %s9
  %s12 = scalar_select 0, %s11, %s9
  %13 = sst [smem:[#allocation2]] %s7
  $region1: #{tpu_custom_call.1} parent=0
    #allocation3 [shape = 'u8[4096]{0}', space=vmem, size = 0x1000, scoped, tag = 'input window, operand 0, single buffered']
    #allocation4 [shape = 's32[1]{0}', space=sflag, size = 0x4, scoped, tag = 'scoped memory for tpu_custom_call.1']
    #allocation5 [shape = 'u8[4096]{0}', space=vmem, size = 0x1000, scoped, tag = 'input window, operand 1, single buffered']
    #allocation6 [shape = 's32[1]{0}', space=sflag, size = 0x4, scoped, tag = 'scoped memory for tpu_custom_call.1']
    #allocation7 [shape = 'u8[12288]{0}', space=vmem, size = 0x3000, scoped, tag = 'input window, operand 2, single buffered']
    #allocation8 [shape = 'u8[4096]{0}', space=vmem, size = 0x1000, scoped, tag = 'input window, operand 3, single buffered']
    #allocation9 [shape = 's32[1]{0}', space=sflag, size = 0x4, scoped, tag = 'scoped memory for tpu_custom_call.1']
    #allocation10 [shape = 'u8[16384]{0}', space=vmem, size = 0x4000, scoped, tag = 'input window, operand 5, single buffered']
    %14 = vsyncpa [#allocation4], 0
    %15 = vsyncpa [#allocation6], 0
    %16 = vsyncpa [#allocation9], 0
    // Predicated region
    $region2: #{tpu_custom_call.1} parent=1 // pred_check
      _
    $region3: #{tpu_custom_call.1} parent=1 // pred_check_branch
      %18 = sbr.rel (0) target = $region5
    $region4: #{tpu_custom_call.1} parent=1 // pred_region
      %20 = vsyncadd [#allocation4], 0
      %s22 = sshll.u32 %s0, 4
      %s23 = int_to_ptr.hbm [resolvable:$true] %s22
      %s24 = sshll.u32 [#allocation3], 4
      %s25 = int_to_ptr.vmem [resolvable:$true] %s24
      %27 = dma.hbm_to_vmem [thread:$0]  %s23, 128, %s25, [#allocation4]
    $region5: #{tpu_custom_call.1} parent=1 // pred_fallthru
      _
    // Predicated region
    $region6: #{tpu_custom_call.1} parent=1 // pred_check
      _
    $region7: #{tpu_custom_call.1} parent=1 // pred_check_branch
      %29 = sbr.rel (0) target = $region9
    $region8: #{tpu_custom_call.1} parent=1 // pred_region
      %31 = vsyncadd [#allocation6], 0
      %s33 = sshll.u32 %s1, 4
      %s34 = int_to_ptr.hbm [resolvable:$true] %s33
      %s35 = sshll.u32 [#allocation5], 4
      %s36 = int_to_ptr.vmem [resolvable:$true] %s35
      %38 = dma.hbm_to_vmem [thread:$0]  %s34, 128, %s36, [#allocation6]
    $region9: #{tpu_custom_call.1} parent=1 // pred_fallthru
      _
    // Predicated region
    $region10: #{tpu_custom_call.1} parent=1 // pred_check
      _
    $region11: #{tpu_custom_call.1} parent=1 // pred_check_branch
      %40 = sbr.rel (0) target = $region13
    $region12: #{tpu_custom_call.1} parent=1 // pred_region
      %42 = vsyncadd [#allocation6], 0
      %s43 = sshll.u32 %s2, 4
      %s44 = int_to_ptr.hbm [resolvable:$true] %s43
      %s45 = sshll.u32 [#allocation7], 4
      %s46 = int_to_ptr.vmem [resolvable:$true] %s45
      %51 = dma.hbm_to_vmem [thread:$0]  %s44, 384, %s46, [#allocation6], 128, 128, 8
    $region13: #{tpu_custom_call.1} parent=1 // pred_fallthru
      _
    // Predicated region
    $region14: #{tpu_custom_call.1} parent=1 // pred_check
      _
    $region15: #{tpu_custom_call.1} parent=1 // pred_check_branch
      %53 = sbr.rel (0) target = $region17
    $region16: #{tpu_custom_call.1} parent=1 // pred_region
      %55 = vsyncadd [#allocation9], 0
      %s57 = sshll.u32 %s3, 4
      %s58 = int_to_ptr.hbm [resolvable:$true] %s57
      %s59 = sshll.u32 [#allocation8], 4
      %s60 = int_to_ptr.vmem [resolvable:$true] %s59
      %62 = dma.hbm_to_vmem [thread:$0]  %s58, 128, %s60, [#allocation9]
    $region17: #{tpu_custom_call.1} parent=1 // pred_fallthru
      _
    // Predicated region
    $region18: #{tpu_custom_call.1} parent=1 // pred_check
      _
    $region19: #{tpu_custom_call.1} parent=1 // pred_check_branch
      %64 = sbr.rel (0) target = $region21
    $region20: #{tpu_custom_call.1} parent=1 // pred_region
      _
    $region21: #{tpu_custom_call.1} parent=1 // pred_fallthru
      _
    // Predicated region
    $region22: #{tpu_custom_call.1} parent=1 // pred_check
      _
    $region23: #{tpu_custom_call.1} parent=1 // pred_check_branch
      %66 = sbr.rel (0) target = $region25
    $region24: #{tpu_custom_call.1} parent=1 // pred_region
      %68 = vsyncadd [#allocation9], 0
      %s69 = sshll.u32 %s5, 4
      %s70 = int_to_ptr.hbm [resolvable:$true] %s69
      %s71 = sshll.u32 [#allocation10], 4
      %s72 = int_to_ptr.vmem [resolvable:$true] %s71
      %77 = dma.hbm_to_vmem [thread:$0]  %s70, 512, %s72, [#allocation9], 128, 128, 8
    $region25: #{tpu_custom_call.1} parent=1 // pred_fallthru
      _
    // Predicated region
    $region26: #{tpu_custom_call.1} parent=1 // pred_check
      _
    $region27: #{tpu_custom_call.1} parent=1 // pred_check_branch
      %79 = sbr.rel (0) target = $region29
    $region28: #{tpu_custom_call.1} parent=1 // pred_region
      _
    $region29: #{tpu_custom_call.1} parent=1 // pred_fallthru
      _
    // Predicated region
    $region30: #{tpu_custom_call.1} parent=1 // pred_check
      _
    $region31: #{tpu_custom_call.1} parent=1 // pred_check_branch
      %81 = sbr.rel (0) target = $region33
    $region32: #{tpu_custom_call.1} parent=1 // pred_region
      _
    $region33: #{tpu_custom_call.1} parent=1 // pred_fallthru
      _
    // Predicated region
    $region34: #{tpu_custom_call.1} parent=1 // pred_check
      _
    $region35: #{tpu_custom_call.1} parent=1 // pred_check_branch
      %83 = sbr.rel (0) target = $region37
    $region36: #{tpu_custom_call.1} parent=1 // pred_region
      %85 = dma.done [#allocation4], 128
    $region37: #{tpu_custom_call.1} parent=1 // pred_fallthru
      _
    // Predicated region
    $region38: #{tpu_custom_call.1} parent=1 // pred_check
      _
    $region39: #{tpu_custom_call.1} parent=1 // pred_check_branch
      %87 = sbr.rel (0) target = $region41
    $region40: #{tpu_custom_call.1} parent=1 // pred_region
      %89 = dma.done [#allocation6], 128
    $region41: #{tpu_custom_call.1} parent=1 // pred_fallthru
      _
    // Predicated region
    $region42: #{tpu_custom_call.1} parent=1 // pred_check
      _
    $region43: #{tpu_custom_call.1} parent=1 // pred_check_branch
      %91 = sbr.rel (0) target = $region45
    $region44: #{tpu_custom_call.1} parent=1 // pred_region
      %93 = dma.done [#allocation6], 384
    $region45: #{tpu_custom_call.1} parent=1 // pred_fallthru
      _
    // Predicated region
    $region46: #{tpu_custom_call.1} parent=1 // pred_check
      _
    $region47: #{tpu_custom_call.1} parent=1 // pred_check_branch
      %95 = sbr.rel (0) target = $region49
    $region48: #{tpu_custom_call.1} parent=1 // pred_region
      %97 = dma.done [#allocation9], 128
    $region49: #{tpu_custom_call.1} parent=1 // pred_fallthru
      _
    // Predicated region
    $region50: #{tpu_custom_call.1} parent=1 // pred_check
      _
    $region51: #{tpu_custom_call.1} parent=1 // pred_check_branch
      %99 = sbr.rel (0) target = $region53
    $region52: #{tpu_custom_call.1} parent=1 // pred_region
      %101 = dma.done [#allocation9], 512
    $region53: #{tpu_custom_call.1} parent=1 // pred_fallthru
      _
    %v102 = vld [vmem:[#allocation3] sm:$0xff]
    %v103 = vld [vmem:[#allocation7] sm:$0xff]
    %v104 = vld [vmem:[#allocation7 + $0x8] sm:$0xff]
    %v105 = vld [vmem:[#allocation7 + $0x10] sm:$0xff]
    %v106 = vld [vmem:[#allocation5] sm:$0xff]
    %v107 = vld [vmem:[#allocation8] sm:$0xff]
    %vm108 = vcmask 64512
    %v110 = vsel %vm108, %v106, 0
    %112 = vmatpush.msra.mxu0 0.0
    %113 = vmatpush.msra.mxu0 0.0
    %114 = vmatpush.msra.mxu0 0.0
    %115 = vmatpush.msra.mxu0 0.0
    %116 = vmatpush.msra.mxu0 0.0
    %117 = vmatpush.msra.mxu0 0.0
    %118 = vmatpush.msra.mxu0 0.0
    %119 = vmatpush.msra.mxu0 0.0
    %120 = vmatpush.msra.mxu0 0.0
    %121 = vmatpush.msra.mxu0 0.0
    %122 = vmatpush.msra.mxu0 0.0
    %123 = vmatpush.msra.mxu0 0.0
    %124 = vmatpush.msra.mxu0 0.0
    %125 = vmatpush.msra.mxu0 0.0
    %126 = vmatpush.msra.mxu0 0.0
    %127 = vmatpush.msra.mxu0 %v107
    %128 = vmatmul.f32.gmra.mxu0 %v110
    %v129 = vpop.f32.mrf.mxu0
    %v130 = vadd.f32 0.0, %v129
    %131 = vdwg.mxu0
    %vm132 = vcmask 195584
    %v134 = vsel %vm132, %v102, 0
    %136 = vmatpush.msra.mxu0 0.0
    %137 = vmatpush.msra.mxu0 0.0
    %138 = vmatpush.msra.mxu0 0.0
    %139 = vmatpush.msra.mxu0 0.0
    %140 = vmatpush.msra.mxu0 0.0
    %141 = vmatpush.msra.mxu0 0.0
    %142 = vmatpush.msra.mxu0 0.0
    %143 = vmatpush.msra.mxu0 0.0
    %144 = vmatpush.msra.mxu0 0.0
    %145 = vmatpush.msra.mxu0 0.0
    %146 = vmatpush.msra.mxu0 0.0
    %147 = vmatpush.msra.mxu0 0.0
    %148 = vmatpush.msra.mxu0 0.0
    %149 = vmatpush.msra.mxu0 %v105
    %150 = vmatpush.msra.mxu0 %v104
    %151 = vmatpush.msra.mxu0 %v103
    %152 = vmatmul.f32.gmra.mxu0 %v134
    %v153 = vpop.f32.mrf.mxu0
    %v154 = vadd.f32 %v130, %v153
    %155 = vdwg.mxu0
    %v156 = vld [vmem:[%s4] sm:$0x1]
    %v157 = vperm.slane %v156, 0
    %v158 = vadd.f32 %v154, %v157
    %v159 = vmax.f32 %v158, 0.0
    %v160 = vld [vmem:[#allocation10] sm:$0xff]
    %v161 = vld [vmem:[#allocation10 + $0x8] sm:$0xff]
    %v162 = vld [vmem:[#allocation10 + $0x10] sm:$0xff]
    %v163 = vld [vmem:[#allocation10 + $0x18] sm:$0xff]
    %v164 = vld [vmem:[%s4 + $0x1] sm:$0x1]
    %v165 = vperm.slane %v164, 0
    %vm166 = vcmask 261120
    %v168 = vsel %vm166, %v159, 0
    %170 = vmatpush.msra.mxu0 0.0
    %171 = vmatpush.msra.mxu0 0.0
    %172 = vmatpush.msra.mxu0 0.0
    %173 = vmatpush.msra.mxu0 0.0
    %174 = vmatpush.msra.mxu0 0.0
    %175 = vmatpush.msra.mxu0 0.0
    %176 = vmatpush.msra.mxu0 0.0
    %177 = vmatpush.msra.mxu0 0.0
    %178 = vmatpush.msra.mxu0 0.0
    %179 = vmatpush.msra.mxu0 0.0
    %180 = vmatpush.msra.mxu0 0.0
    %181 = vmatpush.msra.mxu0 0.0
    %182 = vmatpush.msra.mxu0 %v163
    %183 = vmatpush.msra.mxu0 %v162
    %184 = vmatpush.msra.mxu0 %v161
    %185 = vmatpush.msra.mxu0 %v160
    %186 = vmatmul.f32.gmra.mxu0 %v168
    %v187 = vpop.f32.mrf.mxu0
    %v188 = vadd.f32 %v165, %v187
    %189 = vdwg.mxu0
    %v190 = vmax.f32 %v188, 0.0
    %v191 = vld [vmem:[%s6] sm:$0x1]
    %v193 = vperm.slane %v191, 0
    %v195 = vmul.f32 %v190, %v193
    %v196 = vsel %vm166, %v195, 0.0
    %197 = vadd.xlane.f32.xlu0 %v196
    %v198 = vpop.xlane.xlu0 %197
    %s199 = sld [smem:[#allocation2]]
    %v200 = vstv %s199
    %v201 = vadd.f32 %v198, %v200
    %vm202 = vcmask 7168
    %203 = vst.msk [vmem:[%s8] sm:$0xff] %vm202, %v201
    // Predicated region
    $region54: #{tpu_custom_call.1} parent=1 // pred_check
      _
    $region55: #{tpu_custom_call.1} parent=1 // pred_check_branch
      %205 = sbr.rel (0) target = $region57
    $region56: #{tpu_custom_call.1} parent=1 // pred_region
      _
    $region57: #{tpu_custom_call.1} parent=1 // pred_fallthru
      _
    // Predicated region
    $region58: #{tpu_custom_call.1} parent=1 // pred_check
      _
    $region59: #{tpu_custom_call.1} parent=1 // pred_check_branch
      %207 = sbr.rel (0) target = $region61
    $region60: #{tpu_custom_call.1} parent=1 // pred_region
      _
    $region61: #{tpu_custom_call.1} parent=1 // pred_fallthru
      _
    %208 = vsyncpa [#allocation4], 1
    %209 = vsyncpa [#allocation6], 1
    %210 = vsyncpa [#allocation9], 1

</llo_original>
